<compile_context>
chip_gen: v7x
topology: tpu7x:2x2x1
jax: 0.10.0
libtpu: 0.0.40
codegen_flags: <defaults>
</compile_context>

<pallas_src>
import jax
import jax.numpy as jnp
from jax.experimental import pallas as pl
from jax.experimental.pallas import tpu as pltpu


# ---------------------------------------------------------------------------
# Pallas kernel: elementwise x * sigmoid(x)
# ---------------------------------------------------------------------------
_TILE_BYTES = 4 * 1024 * 1024                     # ~4 MiB per block
_LANE_CHOICES = (1024, 512, 256, 128)             # lane-dense last dims
_BLOCK_ROW_CHOICES = (2048, 1024, 512, 256, 64, 16)  # fixed set, all %8 == 0


def _silu_kernel(x_ref, o_ref):
    # silu(x) = x * sigmoid(x) = 0.5 * x * (1 + tanh(x / 2))
    # One EUP transcendental per element; products stay on the VPU.
    # f32 math keeps v5e (no bf16 VPU/EUP) correct for bf16 I/O.
    x = x_ref[...].astype(jnp.float32)
    y = 0.5 * x * (1.0 + jnp.tanh(0.5 * x))
    o_ref[...] = y.astype(o_ref.dtype)


def _round_up(n, m):
    return ((n + m - 1) // m) * m


def _choose_lane(total):
    """Largest lane width from the fixed set that divides `total` (no pad)."""
    for lane in _LANE_CHOICES:
        if total % lane == 0:
            return lane, False
    return 128, True  # rare fallback: pad by < 128 elements


def _choose_block_rows(rows, lane, itemsize):
    """Block rows: ~_TILE_BYTES per block, >=2 grid steps, fixed-set sizes."""
    target = max(16, _TILE_BYTES // (lane * itemsize))
    # Cap at ~half the rows (rounded to sublane granularity) so the parallel
    # 1-D grid has at least 2 steps -> v7x can shard across both TensorCores.
    half = _round_up(pl.cdiv(rows, 2), 16)
    cap = max(16, min(target, half))
    for c in _BLOCK_ROW_CHOICES:
        if c <= cap:
            return c
    return 16


def _silu_pallas_flat(flat):
    """SiLU over a 1-D array via a lane-dense (rows, lane) tiling."""
    total = flat.shape[0]
    lane, needs_pad = _choose_lane(total)

    if needs_pad:
        padded = _round_up(total, lane)
        flat = jnp.pad(flat, (0, padded - total))
    else:
        padded = total

    rows = padded // lane
    x2d = flat.reshape(rows, lane)

    if rows <= 32:
        # Tiny input: a single full-extent block (always a legal block shape).
        block_rows = rows
    else:
        block_rows = _choose_block_rows(rows, lane, x2d.dtype.itemsize)
    grid = (pl.cdiv(rows, block_rows),)  # ragged last block masked by Pallas

    y2d = pl.pallas_call(
        _silu_kernel,
        out_shape=jax.ShapeDtypeStruct((rows, lane), x2d.dtype),
        grid_spec=pltpu.PrefetchScalarGridSpec(
            num_scalar_prefetch=0,
            grid=grid,
            in_specs=[pl.BlockSpec((block_rows, lane), lambda i: (i, 0))],
            out_specs=pl.BlockSpec((block_rows, lane), lambda i: (i, 0)),
        ),
        compiler_params=pltpu.CompilerParams(
            dimension_semantics=("parallel",),
            # 4 MiB block x (in + out) x double-buffer = 16 MiB working set;
            # fits v7x's 32 MiB scoped VMEM and is trivial on v5e/v6e.
            vmem_limit_bytes=32 * 1024 * 1024,
        ),
    )(x2d)

    y_flat = y2d.reshape(-1)
    if needs_pad:
        y_flat = y_flat[:total]
    return y_flat


@jax.jit
def silu_func(x):
    """The concrete `func` wrapped by LambdaModule, computed in Pallas."""
    orig_shape = x.shape
    y = _silu_pallas_flat(x.reshape(-1))
    return y.reshape(orig_shape)


# ---------------------------------------------------------------------------
# LambdaModule equivalent
# ---------------------------------------------------------------------------
class LambdaModule:
    """JAX/Pallas mirror of the PyTorch LambdaModule: forward = func(*args)."""

    def __init__(self, func):
        self.func = func

    def __call__(self, *args):
        return self.func(*args)


if __name__ == "__main__":
    # Small NCHW input, deterministic.
    key = jax.random.PRNGKey(0)
    x = jax.random.normal(key, (2, 4, 16, 16), dtype=jnp.float32)  # B,C,H,W

    module = LambdaModule(silu_func)
    out = module(x)
    out = jax.block_until_ready(out)

    # Reference check against plain JAX (same semantics as torch x*sigmoid(x)).
    ref = x * jax.nn.sigmoid(x)
    assert out.shape == x.shape and out.dtype == x.dtype
    assert jnp.max(jnp.abs(out - ref)) < 1e-5

    print("KERNEL_OK")
</pallas_src>

<mosaic_0001>
module attributes {stable_mosaic.version = 11 : i64} {
  func.func @_silu_kernel(%arg0: i32, %arg1: memref<2x1024xf32, #tpu.memory_space<vmem>>, %arg2: memref<2x1024xf32, #tpu.memory_space<vmem>>) attributes {dimension_semantics = [#tpu.dimension_semantics<parallel>], iteration_bounds = array<i64: 1>, scalar_prefetch = 0 : i64, scratch_operands = 0 : i64, tpu.core_type = #tpu.core_type<tc>, window_params = [{transform_indices = @transform_0, window_bounds = array<i64: 2, 1024>}, {transform_indices = @transform_1, window_bounds = array<i64: 2, 1024>}]} {
    %c0 = arith.constant 0 : index
    %c0_0 = arith.constant 0 : index
    %0 = vector.load %arg1[%c0, %c0_0] : memref<2x1024xf32, #tpu.memory_space<vmem>>, vector<2x1024xf32>
    %cst = arith.constant 5.000000e-01 : f32
    %1 = vector.broadcast %cst : f32 to vector<2x1024xf32>
    %2 = arith.mulf %1, %0 : vector<2x1024xf32>
    %cst_1 = arith.constant 5.000000e-01 : f32
    %3 = vector.broadcast %cst_1 : f32 to vector<2x1024xf32>
    %4 = arith.mulf %3, %0 : vector<2x1024xf32>
    %5 = math.tanh %4 : vector<2x1024xf32>
    %cst_2 = arith.constant 1.000000e+00 : f32
    %6 = vector.broadcast %cst_2 : f32 to vector<2x1024xf32>
    %7 = arith.addf %6, %5 : vector<2x1024xf32>
    %8 = arith.mulf %2, %7 : vector<2x1024xf32>
    %c0_3 = arith.constant 0 : index
    %c0_4 = arith.constant 0 : index
    %9 = vector.load %arg2[%c0_3, %c0_4] : memref<2x1024xf32, #tpu.memory_space<vmem>>, vector<2x1024xf32>
    tpu.vector_store %arg2[%c0_3, %c0_4], %8 {strides = array<i32>} : memref<2x1024xf32, #tpu.memory_space<vmem>>, vector<2x1024xf32>,
    return
  }
  func.func @transform_0(%arg0: i32) -> (i32, i32) {
    %c0_i32 = arith.constant 0 : i32
    %c0_i32_0 = arith.constant 0 : i32
    return %arg0, %c0_i32 : i32, i32
  }
  func.func @transform_1(%arg0: i32) -> (i32, i32) {
    %c0_i32 = arith.constant 0 : i32
    %c0_i32_0 = arith.constant 0 : i32
    return %arg0, %c0_i32 : i32, i32
  }
}

</mosaic_0001>

<llo_original>
// kernel: silu_func.1
$region0: #{silu_func.1}
  #allocation0 [shape = 'u32[]', space=smem, size = 0x4, offset = 0x4, fixed_abs, tag = 'smem constant byte address 0x4 - core index']
  #allocation1 [shape = 'u32[144,128]{1,0:T(1,128)}', space=vmem, size = 0x12000, scoped, tag = 'internal scratch']
  %s0 = inlined_call_operand.vmem [shape: f32[2,1024], index: 0, kind: input, shape index: {}]
  %s1 = inlined_call_operand.vmem [shape: f32[2,1024], index: 1, kind: output, shape index: {}]
  %s2 = sld [smem:[#allocation0]]
  $region14: #{silu_func.1} parent=0
    _
  %s4 = ssub.s32 1, %s2
  %s5 = scalar_select 0, %s4, %s2
  // Predicated region
  $region2: #{silu_func.1} parent=0 // pred_check
    _
  $region3: #{silu_func.1} parent=0 // pred_check_branch
    %7 = sbr.rel (0) target = $region5
  $region4: #{silu_func.1} parent=0 // pred_region
    _
  $region5: #{silu_func.1} parent=0 // pred_fallthru
    _
  %v8 = vld [vmem:[%s0] sm:$0xff]
  %v9 = vld [vmem:[%s0 + $0x8] sm:$0xff]
  %v10 = vmul.f32 %v8, 0.5
  %v11 = vmul.f32 %v9, 0.5
  %v12 = vtanh.pop %v10
  %v13 = vtanh.pop %v11
  %v14 = vadd.f32 %v12, 1.0
  %v15 = vadd.f32 %v13, 1.0
  %v16 = vmul.f32 %v10, %v14
  %v17 = vmul.f32 %v11, %v15
  %18 = vst [vmem:[%s1] sm:$0xff] %v16
  %19 = vst [vmem:[%s1 + $0x8] sm:$0xff] %v17
  // Predicated region
  $region6: #{silu_func.1} parent=0 // pred_check
    _
  $region7: #{silu_func.1} parent=0 // pred_check_branch
    %21 = sbr.rel (0) target = $region9
  $region8: #{silu_func.1} parent=0 // pred_region
    _
  $region9: #{silu_func.1} parent=0 // pred_fallthru
    _
  // Predicated region
  $region10: #{silu_func.1} parent=0 // pred_check
    _
  $region11: #{silu_func.1} parent=0 // pred_check_branch
    %23 = sbr.rel (0) target = $region13
  $region12: #{silu_func.1} parent=0 // pred_region
    _
  $region13: #{silu_func.1} parent=0 // pred_fallthru
    _

</llo_original>
